<compile_context>
chip_gen: v7x
topology: tpu7x:2x2x1
jax: 0.10.0
libtpu: 0.0.40
codegen_flags: <defaults>
</compile_context>

<pallas_src>
import jax
import jax.numpy as jnp
from jax import lax
from jax.experimental import pallas as pl
from jax.experimental.pallas import tpu as pltpu

EPS = 1e-5


# ---------------------------------------------------------------------------
# Pass 1: per-channel sum and sum-of-squares, tiled over (channel-groups, HW).
# The (1, c_tile) outputs are resident accumulators across the HW grid axis.
# ---------------------------------------------------------------------------
def _stats_kernel(x_ref, sum_ref, sumsq_ref):
    # x_ref:     (B, c_tile, hw_tile)
    # sum_ref:   (1, c_tile)
    # sumsq_ref: (1, c_tile)
    @pl.when(pl.program_id(1) == 0)
    def _():
        sum_ref[...] = jnp.zeros_like(sum_ref)
        sumsq_ref[...] = jnp.zeros_like(sumsq_ref)

    x = x_ref[...].astype(jnp.float32)
    sum_ref[...] += jnp.sum(x, axis=(0, 2))[None, :]
    sumsq_ref[...] += jnp.sum(x * x, axis=(0, 2))[None, :]


# ---------------------------------------------------------------------------
# Pass 2: folded affine, out = x * scale[b, c] + shift[b, c]  (one mul + add).
# ---------------------------------------------------------------------------
def _apply_kernel(x_ref, scale_ref, shift_ref, o_ref):
    # x_ref: (B, c_tile, hw_tile); scale_ref / shift_ref: (B, c_tile)
    x = x_ref[...].astype(jnp.float32)
    scale = scale_ref[...][:, :, None]      # lane broadcast
    shift = shift_ref[...][:, :, None]
    o_ref[...] = (x * scale + shift).astype(o_ref.dtype)


def _pick_tile(size, candidates, min_steps=1):
    for cand in candidates:
        if size % cand == 0 and size // cand >= min_steps:
            return cand
    return size


def categorical_conditional_batchnorm2d(x, y, embed_weight):
    """x: (B, C, H, W); y: (B,) int32 class ids; embed_weight: (num_classes, 2*C)."""
    B, C, H, W = x.shape
    HW = H * W
    out_dtype = x.dtype

    # NCHW kept; contiguous reshape only (no transpose, no HBM copy).
    x3 = x.reshape(B, C, HW)

    # HW on the lane axis (multiples of 128 -> unmasked, lane-dense stores);
    # channels grouped in 128-wide tiles when possible (independent stats ->
    # megacore-parallel on v7x).  Tiles fall back to full extent otherwise.
    hw_tile = _pick_tile(HW, (1024, 512, 256, 128), min_steps=2)
    c_tile = _pick_tile(C, (256, 128))
    n_c = C // c_tile
    n_hw = HW // hw_tile

    # ---- Pass 1: per-channel sum & sum-of-squares -------------------------
    ch_sum, ch_sumsq = pl.pallas_call(
        _stats_kernel,
        out_shape=(
            jax.ShapeDtypeStruct((1, C), jnp.float32),
            jax.ShapeDtypeStruct((1, C), jnp.float32),
        ),
        grid_spec=pltpu.PrefetchScalarGridSpec(
            num_scalar_prefetch=0,
            grid=(n_c, n_hw),
            in_specs=[
                pl.BlockSpec((B, c_tile, hw_tile), lambda ci, hi: (0, ci, hi)),
            ],
            out_specs=(
                pl.BlockSpec((1, c_tile), lambda ci, hi: (0, ci)),
                pl.BlockSpec((1, c_tile), lambda ci, hi: (0, ci)),
            ),
        ),
        compiler_params=pltpu.CompilerParams(
            dimension_semantics=("parallel", "arbitrary")),
    )(x3)

    # ---- Tiny glue: stats + folded per-(B, C) scale / shift ----------------
    n = B * HW
    mean = ch_sum[0] / n                                       # (C,)
    var = jnp.maximum(ch_sumsq[0] / n - mean * mean, 0.0)      # biased var
    inv_std = lax.rsqrt(var + EPS)                             # (C,)

    gamma = jnp.take(embed_weight[:, :C], y, axis=0)           # (B, C)
    beta = jnp.take(embed_weight[:, C:], y, axis=0)            # (B, C)

    scale = (gamma * inv_std[None, :]).astype(jnp.float32)     # (B, C)
    shift = (beta - mean[None, :] * scale).astype(jnp.float32)  # (B, C)

    # ---- Pass 2: apply  out = x * scale + shift ----------------------------
    out = pl.pallas_call(
        _apply_kernel,
        out_shape=jax.ShapeDtypeStruct((B, C, HW), out_dtype),
        grid_spec=pltpu.PrefetchScalarGridSpec(
            num_scalar_prefetch=0,
            grid=(n_c, n_hw),
            in_specs=[
                pl.BlockSpec((B, c_tile, hw_tile), lambda ci, hi: (0, ci, hi)),
                pl.BlockSpec((B, c_tile), lambda ci, hi: (0, ci)),
                pl.BlockSpec((B, c_tile), lambda ci, hi: (0, ci)),
            ],
            out_specs=pl.BlockSpec((B, c_tile, hw_tile),
                                   lambda ci, hi: (0, ci, hi)),
        ),
        compiler_params=pltpu.CompilerParams(
            dimension_semantics=("parallel", "parallel")),
    )(x3, scale, shift)

    return out.reshape(B, C, H, W)


def _reference(x, y, embed_weight):
    B, C, H, W = x.shape
    mean = jnp.mean(x, axis=(0, 2, 3), keepdims=True)
    var = jnp.mean((x - mean) ** 2, axis=(0, 2, 3), keepdims=True)
    out = (x - mean) * lax.rsqrt(var + EPS)
    gamma = jnp.take(embed_weight[:, :C], y, axis=0).reshape(B, C, 1, 1)
    beta = jnp.take(embed_weight[:, C:], y, axis=0).reshape(B, C, 1, 1)
    return gamma * out + beta


if __name__ == "__main__":
    B, C, H, W = 2, 4, 16, 16
    num_classes = 10

    key = jax.random.PRNGKey(0)
    kx, ke, ky = jax.random.split(key, 3)

    x = jax.random.normal(kx, (B, C, H, W), dtype=jnp.float32)
    y = jax.random.randint(ky, (B,), 0, num_classes, dtype=jnp.int32)

    # Mirror the module's __init__:
    #   embed.weight[:, :C] ~ N(1, 0.02), embed.weight[:, C:] = 0
    embed_scale = 1.0 + 0.02 * jax.random.normal(ke, (num_classes, C), dtype=jnp.float32)
    embed_shift = jnp.zeros((num_classes, C), dtype=jnp.float32)
    embed_weight = jnp.concatenate([embed_scale, embed_shift], axis=1)  # (classes, 2C)

    out = categorical_conditional_batchnorm2d(x, y, embed_weight)
    out = jax.block_until_ready(out)

    ref = _reference(x, y, embed_weight)
    assert out.shape == (B, C, H, W)
    assert jnp.allclose(out, ref, atol=1e-4, rtol=1e-5)

    print("KERNEL_OK")
</pallas_src>

<mosaic_0001>
module attributes {stable_mosaic.version = 11 : i64} {
  func.func @_stats_kernel(%arg0: i32, %arg1: i32, %arg2: memref<2x4x128xf32, #tpu.memory_space<vmem>>, %arg3: memref<1x4xf32, #tpu.memory_space<vmem>>, %arg4: memref<1x4xf32, #tpu.memory_space<vmem>>) attributes {dimension_semantics = [#tpu.dimension_semantics<parallel>, #tpu.dimension_semantics<arbitrary>], iteration_bounds = array<i64: 1, 2>, scalar_prefetch = 0 : i64, scratch_operands = 0 : i64, tpu.core_type = #tpu.core_type<tc>, window_params = [{transform_indices = @transform_0, window_bounds = array<i64: 2, 4, 128>}, {transform_indices = @transform_1, window_bounds = array<i64: 1, 4>}, {transform_indices = @transform_2, window_bounds = array<i64: 1, 4>}]} {
    %c0_i32 = arith.constant 0 : i32
    %0 = arith.cmpi eq, %arg1, %c0_i32 : i32
    %1 = arith.extui %0 : i1 to i32
    %c0_i32_0 = arith.constant 0 : i32
    %2 = arith.cmpi ne, %1, %c0_i32_0 : i32
    scf.if %2 {
      %cst_12 = arith.constant 0.000000e+00 : f32
      %15 = vector.broadcast %cst_12 : f32 to vector<1x4xf32>
      %c0_13 = arith.constant 0 : index
      %c0_14 = arith.constant 0 : index
      %16 = vector.load %arg3[%c0_13, %c0_14] : memref<1x4xf32, #tpu.memory_space<vmem>>, vector<1x4xf32>
      tpu.vector_store %arg3[%c0_13, %c0_14], %15 {strides = array<i32>} : memref<1x4xf32, #tpu.memory_space<vmem>>, vector<1x4xf32>,
      %cst_15 = arith.constant 0.000000e+00 : f32
      %17 = vector.broadcast %cst_15 : f32 to vector<1x4xf32>
      %c0_16 = arith.constant 0 : index
      %c0_17 = arith.constant 0 : index
      %18 = vector.load %arg4[%c0_16, %c0_17] : memref<1x4xf32, #tpu.memory_space<vmem>>, vector<1x4xf32>
      tpu.vector_store %arg4[%c0_16, %c0_17], %17 {strides = array<i32>} : memref<1x4xf32, #tpu.memory_space<vmem>>, vector<1x4xf32>,
    } else {
    }
    %c0 = arith.constant 0 : index
    %c0_1 = arith.constant 0 : index
    %c0_2 = arith.constant 0 : index
    %3 = vector.load %arg2[%c0, %c0_1, %c0_2] : memref<2x4x128xf32, #tpu.memory_space<vmem>>, vector<2x4x128xf32>
    %c0_3 = arith.constant 0 : index
    %c0_4 = arith.constant 0 : index
    %4 = vector.load %arg3[%c0_3, %c0_4] : memref<1x4xf32, #tpu.memory_space<vmem>>, vector<1x4xf32>
    %cst = arith.constant dense<0.000000e+00> : vector<4xf32>
    %5 = vector.multi_reduction <add>, %3, %cst [0, 2] : vector<2x4x128xf32> to vector<4xf32>
    %6 = vector.shape_cast %5 : vector<4xf32> to vector<1x4xf32>
    %7 = arith.addf %4, %6 : vector<1x4xf32>
    %c0_5 = arith.constant 0 : index
    %c0_6 = arith.constant 0 : index
    %8 = vector.load %arg3[%c0_5, %c0_6] : memref<1x4xf32, #tpu.memory_space<vmem>>, vector<1x4xf32>
    tpu.vector_store %arg3[%c0_5, %c0_6], %7 {strides = array<i32>} : memref<1x4xf32, #tpu.memory_space<vmem>>, vector<1x4xf32>,
    %c0_7 = arith.constant 0 : index
    %c0_8 = arith.constant 0 : index
    %9 = vector.load %arg4[%c0_7, %c0_8] : memref<1x4xf32, #tpu.memory_space<vmem>>, vector<1x4xf32>
    %10 = arith.mulf %3, %3 : vector<2x4x128xf32>
    %cst_9 = arith.constant dense<0.000000e+00> : vector<4xf32>
    %11 = vector.multi_reduction <add>, %10, %cst_9 [0, 2] : vector<2x4x128xf32> to vector<4xf32>
    %12 = vector.shape_cast %11 : vector<4xf32> to vector<1x4xf32>
    %13 = arith.addf %9, %12 : vector<1x4xf32>
    %c0_10 = arith.constant 0 : index
    %c0_11 = arith.constant 0 : index
    %14 = vector.load %arg4[%c0_10, %c0_11] : memref<1x4xf32, #tpu.memory_space<vmem>>, vector<1x4xf32>
    tpu.vector_store %arg4[%c0_10, %c0_11], %13 {strides = array<i32>} : memref<1x4xf32, #tpu.memory_space<vmem>>, vector<1x4xf32>,
    return
  }
  func.func @transform_0(%arg0: i32, %arg1: i32) -> (i32, i32, i32) {
    %c0_i32 = arith.constant 0 : i32
    %c0_i32_0 = arith.constant 0 : i32
    return %c0_i32, %arg0, %arg1 : i32, i32, i32
  }
  func.func @transform_1(%arg0: i32, %arg1: i32) -> (i32, i32) {
    %c0_i32 = arith.constant 0 : i32
    %c0_i32_0 = arith.constant 0 : i32
    return %c0_i32, %arg0 : i32, i32
  }
  func.func @transform_2(%arg0: i32, %arg1: i32) -> (i32, i32) {
    %c0_i32 = arith.constant 0 : i32
    %c0_i32_0 = arith.constant 0 : i32
    return %c0_i32, %arg0 : i32, i32
  }
}

</mosaic_0001>

<llo_original>
// kernel: tpu_custom_call.1
$region0: #{tpu_custom_call.1}
  #allocation0 [shape = 'u32[]', space=smem, size = 0x4, offset = 0x4, fixed_abs, tag = 'smem constant byte address 0x4 - core index']
  #allocation1 [shape = 'u32[144,128]{1,0:T(1,128)}', space=vmem, size = 0x12000, scoped, tag = 'internal scratch']
  %s0 = inlined_call_operand.hbm [shape: f32[2,4,256], index: 0, kind: input, shape index: {}]
  %s1 = inlined_call_operand.hbm [shape: f32[1,4], index: 1, kind: output, shape index: {0}]
  %s2 = inlined_call_operand.hbm [shape: f32[1,4], index: 2, kind: output, shape index: {1}]
  %3 = xla_tuple %s1, %s2
  %s4 = sld [smem:[#allocation0]]
  $region53: #{tpu_custom_call.1} parent=0
    _
  %s6 = ssub.s32 1, %s4
  %s7 = scalar_select 0, %s6, %s4
  $region1: #{tpu_custom_call.1} parent=0
    #allocation2 [shape = 'u8[8192]{0}', space=vmem, size = 0x2000, scoped, tag = 'input window, operand 0']
    #allocation3 [shape = 's32[2]{0}', space=sflag, size = 0x8, scoped, tag = 'scoped memory for tpu_custom_call.1']
    #allocation4 [shape = 's32[2]{0}', space=sflag, size = 0x8, scoped, tag = 'scoped memory for tpu_custom_call.1']
    #allocation5 [shape = 'u8[512]{0}', space=vmem, size = 0x400, scoped, tag = 'output window, operand 0, single buffered']
    #allocation6 [shape = 'u8[512]{0}', space=vmem, size = 0x400, scoped, tag = 'output window, operand 1, single buffered']
    #allocation7 [shape = 's32[1]{0}', space=sflag, size = 0x4, scoped, tag = 'scoped memory for tpu_custom_call.1']
    %8 = vsyncpa [#allocation3], 0
    %s9 = scalar_lea.sflag [#allocation3], 1
    %10 = vsyncpa %s9, 0
    %11 = vsyncpa [#allocation4], 0
    %12 = vsyncpa [#allocation7], 0
    loop: start=0, step=1, limit=4
    $region2: #{tpu_custom_call.1} parent=1 // loop_pre_header
      _
    $region3: #{tpu_custom_call.1} parent=1 // loop_header
      %s14 = sphi 0, %s18
      %p15 = scmp.ge.s32.totalorder %s14, 4
      %s21 = sphi 0, %s33
      %s22 = sphi 0, %s29
      %s23 = sphi 0, %s21
      %s24 = sphi 0, %s22
      %s25 = sphi 0, %s23
      %s26 = sphi 0, %s24
      %s38 = sphi 0, %s40
      %s41 = sphi 0, %s38
      %s42 = sphi 0, %s41
      %s58 = sphi 0, %s42
      %s64 = sphi 0, %s66
      %s67 = sphi 0, %s64
      %s68 = sphi 0, %s67
      %s84 = sphi 0, %s68
      %s90 = sphi 0, %s92
      %s93 = sphi 0, %s90
      %s94 = sphi 0, %s93
      %s110 = sphi 0, %s94
    $region4: #{tpu_custom_call.1} parent=1 // loop_header_branch
      %17 = sbr.rel (%p15) target = $region8
    $region5: #{tpu_custom_call.1} parent=1 // loop_body
      %s19 = ssub.s32 %s14, 1
      %s20 = ssub.s32 %s14, 2
      %s27 = sadd.s32 1, %s22
      %p28 = scmp.ge.s32.totalorder %s27, 2
      %s29 = scalar_select %p28, 0, %s27
      %s30 = sadd.s32 1, %s21
      %s31 = scalar_select %p28, %s30, %s21
      %p32 = scmp.ge.s32.totalorder %s31, 1
      %s33 = scalar_select %p32, 0, %s31
      %s34 = ssub.s32 %s21, %s33
      %s35 = ssub.s32 %s22, %s29
      %s36 = sor.u32 %s34, %s35
      %p37 = scmp.eq.s32.totalorder %s36, 0
      %s39 = sadd.s32 %s38, 1
      %s40 = scalar_select %p37, %s38, %s39
      %p43 = pneg %p37
      %p44 = scmp.eq.s32.totalorder %s14, 1
      %p45 = por %p43, %p44
      %p46 = scmp.ne.s32.totalorder %s38, %s41
      %p47 = scmp.eq.s32.totalorder %s14, 0
      %p48 = por %p46, %p47
      %p49 = scmp.ne.s32.totalorder %s38, %s41
      %p50 = scmp.eq.s32.totalorder %s19, 1
      %p51 = por %p49, %p50
      %p52 = scmp.ne.s32.totalorder %s41, %s42
      %p53 = scmp.eq.s32.totalorder %s19, 0
      %p54 = por %p52, %p53
      %p55 = scmp.ne.s32.totalorder %s41, %s42
      %p56 = scmp.eq.s32.totalorder %s20, 1
      %p57 = por %p55, %p56
      %p59 = scmp.ne.s32.totalorder %s42, %s58
      %p60 = scmp.eq.s32.totalorder %s20, 0
      %p61 = por %p59, %p60
      %s62 = ssub.s32 %s21, %s33
      %p63 = scmp.eq.s32.totalorder %s62, 0
      %s65 = sadd.s32 %s64, 1
      %s66 = scalar_select %p63, %s64, %s65
      %p69 = pneg %p63
      %p70 = scmp.eq.s32.totalorder %s14, 1
      %p71 = por %p69, %p70
      %p72 = scmp.ne.s32.totalorder %s64, %s67
      %p73 = scmp.eq.s32.totalorder %s14, 0
      %p74 = por %p72, %p73
      %p75 = scmp.ne.s32.totalorder %s64, %s67
      %p76 = scmp.eq.s32.totalorder %s19, 1
      %p77 = por %p75, %p76
      %p78 = scmp.ne.s32.totalorder %s67, %s68
      %p79 = scmp.eq.s32.totalorder %s19, 0
      %p80 = por %p78, %p79
      %p81 = scmp.ne.s32.totalorder %s67, %s68
      %p82 = scmp.eq.s32.totalorder %s20, 1
      %p83 = por %p81, %p82
      %p85 = scmp.ne.s32.totalorder %s68, %s84
      %p86 = scmp.eq.s32.totalorder %s20, 0
      %p87 = por %p85, %p86
      %s88 = ssub.s32 %s21, %s33
      %p89 = scmp.eq.s32.totalorder %s88, 0
      %s91 = sadd.s32 %s90, 1
      %s92 = scalar_select %p89, %s90, %s91
      %p95 = pneg %p89
      %p96 = scmp.eq.s32.totalorder %s14, 1
      %p97 = por %p95, %p96
      %p98 = scmp.ne.s32.totalorder %s90, %s93
      %p99 = scmp.eq.s32.totalorder %s14, 0
      %p100 = por %p98, %p99
      %p101 = scmp.ne.s32.totalorder %s90, %s93
      %p102 = scmp.eq.s32.totalorder %s19, 1
      %p103 = por %p101, %p102
      %p104 = scmp.ne.s32.totalorder %s93, %s94
      %p105 = scmp.eq.s32.totalorder %s19, 0
      %p106 = por %p104, %p105
      %p107 = scmp.ne.s32.totalorder %s93, %s94
      %p108 = scmp.eq.s32.totalorder %s20, 1
      %p109 = por %p107, %p108
      %p111 = scmp.ne.s32.totalorder %s94, %s110
      %p112 = scmp.eq.s32.totalorder %s20, 0
      %p113 = por %p111, %p112
      %p114 = scmp.le.s32.totalorder 1, %s14
      %p115 = scmp.lt.s32.totalorder %s14, 3
      %p116 = pnand %p114, %p115
      %p117 = pneg %p116
      // Predicated region
      $region9: #{tpu_custom_call.1} parent=5 // pred_check
        _
      $region10: #{tpu_custom_call.1} parent=5 // pred_check_branch
        %119 = sbr.rel (%p116) target = $region12
      $region11: #{tpu_custom_call.1} parent=5 // pred_region
        %s120 = ssub.s32 %s14, 1
      $region12: #{tpu_custom_call.1} parent=5 // pred_fallthru
        _
      %p121 = scmp.lt.s32.totalorder %s14, 2
      // Predicated region
      $region13: #{tpu_custom_call.1} parent=5 // pred_check
        %p122 = pneg %p121
      $region14: #{tpu_custom_call.1} parent=5 // pred_check_branch
        %124 = sbr.rel (%p122) target = $region16
      $region15: #{tpu_custom_call.1} parent=5 // pred_region
        // Predicated region
        $region17: #{tpu_custom_call.1} parent=15 // pred_check
          %p125 = pneg %p48
        $region18: #{tpu_custom_call.1} parent=15 // pred_check_branch
          %127 = sbr.rel (%p125) target = $region20
        $region19: #{tpu_custom_call.1} parent=15 // pred_region
          %s128 = sand.u32 %s38, 1
          %s129 = scalar_lea.sflag [#allocation3], %s128
          %s130 = sand.u32 %s38, 1
          %s131 = smul.addr %s130, 8
          %s132 = scalar_lea.vmem [#allocation2], %s131
          %s134 = ssub.s32 128, 128
          %135 = vsyncadd %s129, %s134
          %s136 = smul.addr %s21, 2
          %s137 = sadd.s32 %s22, %s136
          %s138 = smul.addr %s137, 64
          %s139 = scalar_lea.hbm %s0, %s138
          %s140 = sshll.u32 %s132, 4
          %s141 = int_to_ptr.vmem [resolvable:$true] %s140
          %146 = dma.hbm_to_vmem [thread:$0]  %s139, 128, %s141, %s129, 128, 64, 4
        $region20: #{tpu_custom_call.1} parent=15 // pred_fallthru
          _
      $region16: #{tpu_custom_call.1} parent=5 // pred_fallthru
        _
      %p147 = scmp.le.s32.totalorder 1, %s14
      %p148 = scmp.lt.s32.totalorder %s14, 3
      %p149 = pnand %p147, %p148
      %p150 = pneg %p149
      // Predicated region
      $region21: #{tpu_custom_call.1} parent=5 // pred_check
        _
      $region22: #{tpu_custom_call.1} parent=5 // pred_check_branch
        %152 = sbr.rel (%p149) target = $region24
      $region23: #{tpu_custom_call.1} parent=5 // pred_region
        %s153 = ssub.s32 %s14, 1
        %s154 = sand.u32 %s41, 1
        %s155 = scalar_lea.sflag [#allocation3], %s154
        %s156 = sand.u32 %s41, 1
        %s157 = smul.addr %s156, 8
        %s158 = scalar_lea.vmem [#allocation2], %s157
        // Predicated region
        $region25: #{tpu_custom_call.1} parent=23 // pred_check
          %p159 = pneg %p54
        $region26: #{tpu_custom_call.1} parent=23 // pred_check_branch
          %161 = sbr.rel (%p159) target = $region28
        $region27: #{tpu_custom_call.1} parent=23 // pred_region
          %162 = dma.done %s155, 128
        $region28: #{tpu_custom_call.1} parent=23 // pred_fallthru
          _
        %s163 = sand.u32 %s41, 1
        %s164 = scalar_lea.sflag [#allocation3], %s163
        %s165 = sand.u32 %s41, 1
        %s166 = smul.addr %s165, 8
        %s167 = scalar_lea.vmem [#allocation2], %s166
        %p168 = pneg %p54
        %p169 = pneg %p51
        %p170 = pneg %p80
        %p171 = pneg %p77
        %p172 = pneg %p106
        %p173 = pneg %p103
        %p174 = scmp.eq.s32.totalorder %s24, 0
        // Predicated region
        $region29: #{tpu_custom_call.1} parent=23 // pred_check
          %p175 = pneg %p174
        $region30: #{tpu_custom_call.1} parent=23 // pred_check_branch
          %177 = sbr.rel (%p175) target = $region32
        $region31: #{tpu_custom_call.1} parent=23 // pred_region
          %vm178 = vcmask 24576
          %179 = vst.msk [vmem:[#allocation5] sm:$0x1] %vm178, 0.0
          %180 = vst.msk [vmem:[#allocation6] sm:$0x1] %vm178, 0.0
        $region32: #{tpu_custom_call.1} parent=23 // pred_fallthru
          _
        %v181 = vld [vmem:[%s158] sm:$0xf]
        %v182 = vld [vmem:[%s158 + $0x4] sm:$0xf]
        %v183 = vld [vmem:[#allocation5] sm:$0x1]
        %vm184 = vcmask 1043456
        %v185 = vsel %vm184, %v181, 0.0
        %v186 = vsel %vm184, %v182, 0.0
        %v187 = vadd.f32 %v185, %v186
        %188 = vadd.xlane.f32.xlu0 %v187
        %v189 = vpop.xlane.xlu0 %188
        %v191 = vlaneseq
        %v192 = vshrl.u32 %v191, 7
        %v193 = vsub.s32 0, %v192
        %v194 = vrot.slane %v189, %v193
        %v195 = vlaneseq
        %v196 = vshrl.u32 %v195, 7
        %v197 = vsub.s32 1, %v196
        %v198 = vrot.slane %v189, %v197
        %v199 = vlaneseq
        %v200 = vshrl.u32 %v199, 7
        %v201 = vsub.s32 2, %v200
        %v202 = vrot.slane %v189, %v201
        %v203 = vlaneseq
        %v204 = vshrl.u32 %v203, 7
        %v205 = vsub.s32 3, %v204
        %v206 = vrot.slane %v189, %v205
        %v207 = vcombine.low %v194, %v198
        %v208 = vcombine.low %v202, %v206
        %v210 = vunpack.c.l.s4 1966171168
        %v211 = vunpack.c.0.s8 %v210
        %v212 = vlaneseq
        %v213 = vshrl.u32 %v212, 7
        %v214 = vsub.s32 %v211, %v213
        %v215 = vrot.slane %v207, %v214
        %v217 = vunpack.c.l.s4 1966171168
        %v218 = vunpack.c.0.s8 %v217
        %v219 = vlaneseq
        %v220 = vshrl.u32 %v219, 7
        %v221 = vsub.s32 %v218, %v220
        %v222 = vrot.slane %v208, %v221
        %v223 = vcombine.low %v215, %v222
        %v225 = vunpack.c.l.s4 1966171168
        %v226 = vunpack.c.0.s8 %v225
        %v227 = vlaneseq
        %v228 = vshrl.u32 %v227, 7
        %v229 = vsub.s32 %v226, %v228
        %v230 = vrot.slane %v223, %v229
        %231 = vset.pattern.permute.xlu0 0
        %232 = vperm.xlu0 %231, %v230
        %v233 = vpop.permute.xlu0 %232
        %v234 = vlaneseq
        %v235 = vand.u32 %v234, 127
        %v236 = vlaneseq
        %v237 = vshrl.u32 %v236, 7
        %v238 = vsub.s32 %v235, %v237
        %v239 = vrot.slane %v233, %v238
        %v241 = vunpack.c.l.s4 1966171168
        %v242 = vunpack.c.0.s8 %v241
        %v243 = vlaneseq
        %v244 = vshrl.u32 %v243, 7
        %v245 = vsub.s32 %v242, %v244
        %v246 = vrot.slane %v239, %v245
        %v248 = vunpack.c.l.s4 1966171168
        %v249 = vunpack.c.0.s8 %v248
        %v250 = vlaneseq
        %v251 = vshrl.u32 %v250, 7
        %v252 = vsub.s32 %v249, %v251
        %v253 = vrot.slane %v246, %v252
        %v255 = vadd.f32 %v183, %v253
        %vm256 = vcmask 24576
        %257 = vst.msk [vmem:[#allocation5] sm:$0x1] %vm256, %v255
        %v258 = vld [vmem:[#allocation6] sm:$0x1]
        %v259 = vmul.f32 %v181, %v181
        %v260 = vmul.f32 %v182, %v182
        %v261 = vsel %vm184, %v259, 0.0
        %v262 = vsel %vm184, %v260, 0.0
        %v263 = vadd.f32 %v261, %v262
        %264 = vadd.xlane.f32.xlu0 %v263
        %v265 = vpop.xlane.xlu0 %264
        %v267 = vlaneseq
        %v268 = vshrl.u32 %v267, 7
        %v269 = vsub.s32 0, %v268
        %v270 = vrot.slane %v265, %v269
        %v271 = vlaneseq
        %v272 = vshrl.u32 %v271, 7
        %v273 = vsub.s32 1, %v272
        %v274 = vrot.slane %v265, %v273
        %v275 = vlaneseq
        %v276 = vshrl.u32 %v275, 7
        %v277 = vsub.s32 2, %v276
        %v278 = vrot.slane %v265, %v277
        %v279 = vlaneseq
        %v280 = vshrl.u32 %v279, 7
        %v281 = vsub.s32 3, %v280
        %v282 = vrot.slane %v265, %v281
        %v283 = vcombine.low %v270, %v274
        %v284 = vcombine.low %v278, %v282
        %v286 = vunpack.c.l.s4 1966171168
        %v287 = vunpack.c.0.s8 %v286
        %v288 = vlaneseq
        %v289 = vshrl.u32 %v288, 7
        %v290 = vsub.s32 %v287, %v289
        %v291 = vrot.slane %v283, %v290
        %v293 = vunpack.c.l.s4 1966171168
        %v294 = vunpack.c.0.s8 %v293
        %v295 = vlaneseq
        %v296 = vshrl.u32 %v295, 7
        %v297 = vsub.s32 %v294, %v296
        %v298 = vrot.slane %v284, %v297
        %v299 = vcombine.low %v291, %v298
        %v301 = vunpack.c.l.s4 1966171168
        %v302 = vunpack.c.0.s8 %v301
        %v303 = vlaneseq
        %v304 = vshrl.u32 %v303, 7
        %v305 = vsub.s32 %v302, %v304
        %v306 = vrot.slane %v299, %v305
        %307 = vset.pattern.permute.xlu0 0
        %308 = vperm.xlu0 %307, %v306
        %v309 = vpop.permute.xlu0 %308
        %v310 = vlaneseq
        %v311 = vshrl.u32 %v310, 7
        %v312 = vsub.s32 %v235, %v311
        %v313 = vrot.slane %v309, %v312
        %v315 = vunpack.c.l.s4 1966171168
        %v316 = vunpack.c.0.s8 %v315
        %v317 = vlaneseq
        %v318 = vshrl.u32 %v317, 7
        %v319 = vsub.s32 %v316, %v318
        %v320 = vrot.slane %v313, %v319
        %v322 = vunpack.c.l.s4 1966171168
        %v323 = vunpack.c.0.s8 %v322
        %v324 = vlaneseq
        %v325 = vshrl.u32 %v324, 7
        %v326 = vsub.s32 %v323, %v325
        %v327 = vrot.slane %v320, %v326
        %v329 = vadd.f32 %v258, %v327
        %330 = vst.msk [vmem:[#allocation6] sm:$0x1] %vm256, %v329
        // Predicated region
        $region33: #{tpu_custom_call.1} parent=23 // pred_check
          %p331 = pneg %p77
        $region34: #{tpu_custom_call.1} parent=23 // pred_check_branch
          %333 = sbr.rel (%p331) target = $region36
        $region35: #{tpu_custom_call.1} parent=23 // pred_region
          %s335 = ssub.s32 16, 16
          %336 = vsyncadd [#allocation4], %s335
          %s337 = smul.addr %s23, 16
          %s338 = scalar_lea.hbm %s1, %s337
          %s340 = sshll.u32 [#allocation5], 4
          %s341 = int_to_ptr.vmem [resolvable:$true] %s340
          %343 = dma.vmem_to_hbm [thread:$0]  %s341, 16, %s338, [#allocation4]
        $region36: #{tpu_custom_call.1} parent=23 // pred_fallthru
          _
        // Predicated region
        $region37: #{tpu_custom_call.1} parent=23 // pred_check
          %p344 = pneg %p103
        $region38: #{tpu_custom_call.1} parent=23 // pred_check_branch
          %346 = sbr.rel (%p344) target = $region40
        $region39: #{tpu_custom_call.1} parent=23 // pred_region
          %s348 = ssub.s32 16, 16
          %349 = vsyncadd [#allocation7], %s348
          %s350 = smul.addr %s23, 16
          %s351 = scalar_lea.hbm %s2, %s350
          %s353 = sshll.u32 [#allocation6], 4
          %s354 = int_to_ptr.vmem [resolvable:$true] %s353
          %356 = dma.vmem_to_hbm [thread:$0]  %s354, 16, %s351, [#allocation7]
        $region40: #{tpu_custom_call.1} parent=23 // pred_fallthru
          _
        // Predicated region
        $region41: #{tpu_custom_call.1} parent=23 // pred_check
          %p357 = pneg %p77
        $region42: #{tpu_custom_call.1} parent=23 // pred_check_branch
          %359 = sbr.rel (%p357) target = $region44
        $region43: #{tpu_custom_call.1} parent=23 // pred_region
          %360 = dma.done [#allocation4], 16
        $region44: #{tpu_custom_call.1} parent=23 // pred_fallthru
          _
        // Predicated region
        $region45: #{tpu_custom_call.1} parent=23 // pred_check
          %p361 = pneg %p103
        $region46: #{tpu_custom_call.1} parent=23 // pred_check_branch
          %363 = sbr.rel (%p361) target = $region48
        $region47: #{tpu_custom_call.1} parent=23 // pred_region
          %364 = dma.done [#allocation7], 16
        $region48: #{tpu_custom_call.1} parent=23 // pred_fallthru
          _
      $region24: #{tpu_custom_call.1} parent=5 // pred_fallthru
        _
      %p365 = scmp.le.s32.totalorder 2, %s14
      // Predicated region
      $region49: #{tpu_custom_call.1} parent=5 // pred_check
        %p366 = pneg %p365
      $region50: #{tpu_custom_call.1} parent=5 // pred_check_branch
        %368 = sbr.rel (%p366) target = $region52
      $region51: #{tpu_custom_call.1} parent=5 // pred_region
        %s369 = ssub.s32 %s14, 2
      $region52: #{tpu_custom_call.1} parent=5 // pred_fallthru
        _
    $region6: #{tpu_custom_call.1} parent=1 // loop_footer
      %s18 = sadd.s32 1, %s14
    $region7: #{tpu_custom_call.1} parent=1 // loop_footer_branch
      %13 = sbr.rel target = $region3
    $region8: #{tpu_custom_call.1} parent=1 // loop_exit
      _
    %370 = vsyncpa [#allocation3], 1
    %s371 = scalar_lea.sflag [#allocation3], 1
    %372 = vsyncpa %s371, 1
    %373 = vsyncpa [#allocation4], 1
    %s374 = scalar_lea.sflag [#allocation4], 1
    %375 = vsyncpa %s374, 1
    %376 = vsyncpa [#allocation7], 1

</llo_original>
